<compile_context>
chip_gen: v6e
topology: v6e:2x2x1
jax: 0.10.0
libtpu: 0.0.40
codegen_flags: <defaults>
</compile_context>

<pallas_src>
import math
import jax
import jax.numpy as jnp
from jax.experimental import pallas as pl
from jax.experimental.pallas import tpu as pltpu

LN_EPS = 1e-5  # nn.LayerNorm default


def _round_up(x, m):
    return ((x + m - 1) // m) * m


def _vmem_budget_bytes():
    """~85% of per-core VMEM capacity (headroom for Mosaic internal scratch).
    Falls back to 64 MiB (v7x-safe) if the query is unavailable."""
    cap = 64 * 2**20
    try:
        info = pltpu.get_tpu_info()
        c = getattr(info, "vmem_capacity_bytes", None)
        if c:
            cap = int(c)
    except Exception:
        pass
    return int(cap * 0.85)


def _pick_rows(target, max_rows, n, sublane):
    cap = max(sublane, min(int(max_rows), _round_up(n, sublane)))
    rows = max(sublane, min(int(target), cap))
    if rows >= 256:
        rows = (rows // 256) * 256            # full-height MXU multiples on v6e/v7x
    rows = max(sublane, (rows // sublane) * sublane)
    return rows


# ------------- resident-weight (fused) kernel: grid = (row tiles,) -------------
def residual_block_kernel_fused(x_ref, gamma_ref, beta_ref,
                                w1_ref, b1_ref, w2_ref, b2_ref, o_ref):
    x = x_ref[...].astype(jnp.float32)
    # single-pass LN statistics: var = E[x^2] - E[x]^2
    mean = jnp.mean(x, axis=-1, keepdims=True)
    var = jnp.maximum(jnp.mean(x * x, axis=-1, keepdims=True) - mean * mean, 0.0)
    y = (x - mean) * jax.lax.rsqrt(var + LN_EPS)
    y = y * gamma_ref[...].astype(jnp.float32) + beta_ref[...].astype(jnp.float32)
    # MXU operands in native weight dtype; accumulation forced to f32
    h = jnp.dot(y.astype(w1_ref.dtype), w1_ref[...], preferred_element_type=jnp.float32)
    h = jnp.maximum(h + b1_ref[...].astype(jnp.float32), 0.0)
    out = jnp.dot(h.astype(w2_ref.dtype), w2_ref[...], preferred_element_type=jnp.float32)
    out = out + b2_ref[...].astype(jnp.float32) + x
    o_ref[...] = out.astype(o_ref.dtype)


# ---------- K-tiled fallback kernel (large H): grid = (row tiles, K over 4H) ----------
def residual_block_kernel_ktiled(x_ref, gamma_ref, beta_ref,
                                 w1_ref, b1_ref, w2_ref, b2_ref,
                                 o_ref, y_ref, acc_ref):
    k = pl.program_id(1)

    # LayerNorm once per row tile; y reused for every K step
    @pl.when(k == 0)
    def _():
        x = x_ref[...].astype(jnp.float32)
        mean = jnp.mean(x, axis=-1, keepdims=True)
        var = jnp.maximum(jnp.mean(x * x, axis=-1, keepdims=True) - mean * mean, 0.0)
        y = (x - mean) * jax.lax.rsqrt(var + LN_EPS)
        y = y * gamma_ref[...].astype(jnp.float32) + beta_ref[...].astype(jnp.float32)
        y_ref[...] = y.astype(y_ref.dtype)
        acc_ref[...] = jnp.zeros_like(acc_ref)

    # fc1 slab + ReLU + partial fc2, accumulated in f32
    h = jnp.dot(y_ref[...], w1_ref[...], preferred_element_type=jnp.float32)
    h = jnp.maximum(h + b1_ref[...].astype(jnp.float32), 0.0)
    acc_ref[...] += jnp.dot(h.astype(w2_ref.dtype), w2_ref[...],
                            preferred_element_type=jnp.float32)

    # finalize: bias2 + residual add, single lane-dense store
    @pl.when(k == pl.num_programs(1) - 1)
    def _():
        out = (acc_ref[...] + b2_ref[...].astype(jnp.float32)
               + x_ref[...].astype(jnp.float32))
        o_ref[...] = out.astype(o_ref.dtype)


def residual_block(x, gamma, beta, w1, b1, w2, b2, *,
                   block_rows=None, k_tile=None, interpret=False):
    """x: (..., H). Params (PyTorch layout): gamma/beta (H,), w1 (4H, H), b1 (4H,),
    w2 (H, 4H), b2 (H,). Weights are transposed to (in, out) for the kernel.
    Note: when weights are bf16 and x is f32, the LN output is fed to fc1 in bf16
    (standard mixed precision; reference tolerances should be loosened for bf16)."""
    orig_shape = x.shape
    H = orig_shape[-1]
    x2 = x.reshape(-1, H)
    N = x2.shape[0]

    H4 = w1.shape[0]
    itemsize = jnp.dtype(x.dtype).itemsize
    wsize = jnp.dtype(w1.dtype).itemsize
    sublane = 8 * max(1, 4 // itemsize)            # 8 rows f32, 16 rows bf16

    budget = _vmem_budget_bytes()
    small = 4 * (3 * H + H4) * max(itemsize, wsize)  # gamma/beta/b1/b2 blocks (2-deep)

    # ---- path selection: keep weights VMEM-resident whenever they fit ----
    resident_bytes = 2 * 2 * H * H4 * wsize          # w1^T + w2^T, double-buffered
    force_ktiled = (k_tile is not None and H4 % 128 == 0
                    and _round_up(k_tile, 128) < H4)
    use_fused = (not force_ktiled) and (
        H4 % 128 != 0                                # non-lane-aligned 4H: take it whole
        or resident_bytes + small <= int(0.6 * budget))

    gamma2 = gamma.reshape(1, H)
    beta2 = beta.reshape(1, H)
    w1_t = w1.T                                      # (H, 4H)
    b1_2 = b1.reshape(1, H4)
    w2_t = w2.T                                      # (4H, H)
    b2_2 = b2.reshape(1, H)

    tk = H4
    n_k = 1
    if use_fused:
        # per-row VMEM: x/o double-buffered + f32 temporaries (y/out ~2H, h = H4)
        per_row = 4 * H * itemsize + 4 * (2 * H + H4)
        avail = budget - resident_bytes - small
        max_rows = avail // per_row if avail > 0 else sublane
        rows = _pick_rows(block_rows if block_rows is not None else 512,
                          max_rows, N, sublane)
    else:
        # ---- K-tiled: only (H,tk)+(tk,H) weight slabs resident at a time ----
        tk = min(_round_up(k_tile if k_tile is not None else 1024, 128), H4)
        while H4 % tk:
            tk -= 128
        while True:
            slab = 2 * 2 * H * tk * wsize            # w1/w2 slabs, double-buffered
            per_row = 4 * H * itemsize + H * wsize + 4 * H + 4 * tk
            avail = budget - slab - small
            max_rows = avail // per_row if avail > 0 else 0
            if tk == 128 or max_rows >= min(256, _round_up(N, sublane)):
                break
            nxt = tk - 128
            while nxt > 128 and H4 % nxt:
                nxt -= 128
            tk = max(128, nxt)
        rows = _pick_rows(block_rows if block_rows is not None else 512,
                          max(max_rows, sublane), N, sublane)
        n_k = H4 // tk
        if n_k == 1:                                 # degenerate: single slab == resident
            use_fused = True
            tk = H4

    n_row_tiles = pl.cdiv(N, rows)
    N_pad = n_row_tiles * rows
    if N_pad != N:
        x2 = jnp.pad(x2, ((0, N_pad - N), (0, 0)))   # zero rows are LN-safe (var+eps)

    # ---- VMEM estimate & scoped limit (never request full physical VMEM) ----
    est_vmem = (4 * rows * H * itemsize + small + 2 * 2 * H * tk * wsize
                + (rows * (2 * H + H4) * 4 if use_fused
                   else rows * H * wsize + rows * H * 4 + rows * tk * 4))
    vmem_limit = int(min(budget, max(2 * est_vmem, 16 * 2**20)))

    # ---- advisory cost estimate: weights read once when resident ----
    weight_stream = 2 * H * H4 * wsize * (1 if use_fused else n_row_tiles)
    cost = pl.CostEstimate(
        flops=int(4 * N_pad * H * H4),               # two matmuls: 2*N*H*4H each
        transcendentals=int(N_pad),                  # one rsqrt per row
        bytes_accessed=int(2 * N_pad * H * itemsize + weight_stream
                           + (3 * H + H4) * wsize),
    )

    if use_fused:
        grid_spec = pltpu.PrefetchScalarGridSpec(
            num_scalar_prefetch=0,
            grid=(n_row_tiles,),
            in_specs=[
                pl.BlockSpec((rows, H), lambda i: (i, 0)),   # x rows
                pl.BlockSpec((1, H), lambda i: (0, 0)),      # gamma
                pl.BlockSpec((1, H), lambda i: (0, 0)),      # beta
                pl.BlockSpec((H, H4), lambda i: (0, 0)),     # w1^T (constant -> 1 DMA)
                pl.BlockSpec((1, H4), lambda i: (0, 0)),     # b1
                pl.BlockSpec((H4, H), lambda i: (0, 0)),     # w2^T (constant -> 1 DMA)
                pl.BlockSpec((1, H), lambda i: (0, 0)),      # b2
            ],
            out_specs=pl.BlockSpec((rows, H), lambda i: (i, 0)),
        )
        kernel = residual_block_kernel_fused
        dim_sem = ("parallel",)
    else:
        grid_spec = pltpu.PrefetchScalarGridSpec(
            num_scalar_prefetch=0,
            grid=(n_row_tiles, n_k),
            in_specs=[
                pl.BlockSpec((rows, H), lambda i, k: (i, 0)),  # x rows
                pl.BlockSpec((1, H), lambda i, k: (0, 0)),     # gamma
                pl.BlockSpec((1, H), lambda i, k: (0, 0)),     # beta
                pl.BlockSpec((H, tk), lambda i, k: (0, k)),    # w1^T slab
                pl.BlockSpec((1, tk), lambda i, k: (0, k)),    # b1 slab
                pl.BlockSpec((tk, H), lambda i, k: (k, 0)),    # w2^T slab
                pl.BlockSpec((1, H), lambda i, k: (0, 0)),     # b2
            ],
            out_specs=pl.BlockSpec((rows, H), lambda i, k: (i, 0)),
            scratch_shapes=[
                pltpu.VMEM((rows, H), w1.dtype),      # y = LN(x), reused over K
                pltpu.VMEM((rows, H), jnp.float32),   # f32 accumulator
            ],
        )
        kernel = residual_block_kernel_ktiled
        dim_sem = ("parallel", "arbitrary")

    out = pl.pallas_call(
        kernel,
        out_shape=jax.ShapeDtypeStruct((N_pad, H), x.dtype),
        grid_spec=grid_spec,
        compiler_params=pltpu.CompilerParams(
            dimension_semantics=dim_sem,
            vmem_limit_bytes=vmem_limit,
        ),
        cost_estimate=cost,
        interpret=interpret,
    )(x2, gamma2, beta2, w1_t, b1_2, w2_t, b2_2)

    if N_pad != N:
        out = out[:N]
    return out.reshape(orig_shape)


def init_params(key, hidden_dim, dtype=jnp.float32):
    """LayerNorm: gamma=1, beta=0. Linear: He-normal weights, zero biases."""
    k1, k2 = jax.random.split(key)
    H, H4 = hidden_dim, hidden_dim * 4
    gamma = jnp.ones((H,), dtype)
    beta = jnp.zeros((H,), dtype)
    w1 = (jax.random.normal(k1, (H4, H), jnp.float32) * math.sqrt(2.0 / H)).astype(dtype)
    b1 = jnp.zeros((H4,), dtype)
    w2 = (jax.random.normal(k2, (H, H4), jnp.float32) * math.sqrt(2.0 / H4)).astype(dtype)
    b2 = jnp.zeros((H,), dtype)
    return gamma, beta, w1, b1, w2, b2


def reference(x, gamma, beta, w1, b1, w2, b2):
    xf = x.astype(jnp.float32)
    mean = jnp.mean(xf, axis=-1, keepdims=True)
    var = jnp.mean((xf - mean) ** 2, axis=-1, keepdims=True)
    y = (xf - mean) / jnp.sqrt(var + LN_EPS) * gamma + beta
    h = jnp.maximum(y @ w1.T + b1, 0.0)
    out = h @ w2.T + b2
    return (xf + out).astype(x.dtype)


if __name__ == "__main__":
    key = jax.random.PRNGKey(0)
    kx, kp, kx2, kp2 = jax.random.split(key, 4)

    # x: (batch=2, seq=8, hidden=32), f32
    hidden_dim, batch, seq = 32, 2, 8
    dtype = jnp.float32
    x = jax.random.normal(kx, (batch, seq, hidden_dim), dtype)
    params = init_params(kp, hidden_dim, dtype)
    ref = reference(x, *params)

    # 1) default: resident-weight fused path (weights DMA'd once for the whole grid)
    out = jax.block_until_ready(residual_block(x, *params))
    assert out.shape == x.shape and out.dtype == x.dtype
    assert jnp.allclose(out, ref, atol=1e-4, rtol=1e-4), "mismatch (fused)"

    # 2) forced multi-row-tile grid (exercises the pipelined / parallel row axis)
    out2 = jax.block_until_ready(residual_block(x, *params, block_rows=8))
    assert jnp.allclose(out2, ref, atol=1e-4, rtol=1e-4), "mismatch (row-tiled)"

    # 3) ragged N (exercises the zero-padding path)
    x_r = x[:, :7, :]
    out3 = jax.block_until_ready(residual_block(x_r, *params))
    assert jnp.allclose(out3, reference(x_r, *params), atol=1e-4, rtol=1e-4), \
        "mismatch (ragged N)"

    # 4) K-tiled fallback path (hidden=64 -> 4H=256, tk=128 -> 2 K steps, f32 acc)
    x_k = jax.random.normal(kx2, (batch, seq, 64), dtype)
    params_k = init_params(kp2, 64, dtype)
    out4 = jax.block_until_ready(residual_block(x_k, *params_k, k_tile=128))
    assert jnp.allclose(out4, reference(x_k, *params_k), atol=1e-4, rtol=1e-4), \
        "mismatch (K-tiled)"

    print("KERNEL_OK")
</pallas_src>

<mosaic_0001>
module attributes {stable_mosaic.version = 11 : i64} {
  func.func @residual_block_kernel_fused(%arg0: i32, %arg1: memref<16x32xf32, #tpu.memory_space<vmem>>, %arg2: memref<1x32xf32, #tpu.memory_space<vmem>>, %arg3: memref<1x32xf32, #tpu.memory_space<vmem>>, %arg4: memref<32x128xf32, #tpu.memory_space<vmem>>, %arg5: memref<1x128xf32, #tpu.memory_space<vmem>>, %arg6: memref<128x32xf32, #tpu.memory_space<vmem>>, %arg7: memref<1x32xf32, #tpu.memory_space<vmem>>, %arg8: memref<16x32xf32, #tpu.memory_space<vmem>>) attributes {dimension_semantics = [#tpu.dimension_semantics<parallel>], iteration_bounds = array<i64: 1>, scalar_prefetch = 0 : i64, scratch_operands = 0 : i64, tpu.core_type = #tpu.core_type<tc>, window_params = [{transform_indices = @transform_0, window_bounds = array<i64: 16, 32>}, {pipeline_mode = #tpu.pipeline_mode<synchronous>, transform_indices = @transform_1, window_bounds = array<i64: 1, 32>}, {pipeline_mode = #tpu.pipeline_mode<synchronous>, transform_indices = @transform_2, window_bounds = array<i64: 1, 32>}, {pipeline_mode = #tpu.pipeline_mode<synchronous>, transform_indices = @transform_3, window_bounds = array<i64: 32, 128>}, {pipeline_mode = #tpu.pipeline_mode<synchronous>, transform_indices = @transform_4, window_bounds = array<i64: 1, 128>}, {pipeline_mode = #tpu.pipeline_mode<synchronous>, transform_indices = @transform_5, window_bounds = array<i64: 128, 32>}, {pipeline_mode = #tpu.pipeline_mode<synchronous>, transform_indices = @transform_6, window_bounds = array<i64: 1, 32>}, {transform_indices = @transform_7, window_bounds = array<i64: 16, 32>}]} {
    %c0 = arith.constant 0 : index
    %c0_0 = arith.constant 0 : index
    %0 = vector.load %arg1[%c0, %c0_0] : memref<16x32xf32, #tpu.memory_space<vmem>>, vector<16x32xf32>
    %cst = arith.constant dense<0.000000e+00> : vector<16xf32>
    %1 = vector.multi_reduction <add>, %0, %cst [1] : vector<16x32xf32> to vector<16xf32>
    %2 = vector.shape_cast %1 : vector<16xf32> to vector<16x1xf32>
    %cst_1 = arith.constant 3.200000e+01 : f32
    %3 = vector.broadcast %cst_1 : f32 to vector<16x1xf32>
    %4 = arith.divf %2, %3 : vector<16x1xf32>
    %5 = arith.mulf %0, %0 : vector<16x32xf32>
    %cst_2 = arith.constant dense<0.000000e+00> : vector<16xf32>
    %6 = vector.multi_reduction <add>, %5, %cst_2 [1] : vector<16x32xf32> to vector<16xf32>
    %7 = vector.shape_cast %6 : vector<16xf32> to vector<16x1xf32>
    %cst_3 = arith.constant 3.200000e+01 : f32
    %8 = vector.broadcast %cst_3 : f32 to vector<16x1xf32>
    %9 = arith.divf %7, %8 : vector<16x1xf32>
    %10 = arith.mulf %4, %4 : vector<16x1xf32>
    %11 = arith.subf %9, %10 : vector<16x1xf32>
    %cst_4 = arith.constant 0.000000e+00 : f32
    %12 = vector.broadcast %cst_4 : f32 to vector<16x1xf32>
    %13 = arith.maximumf %11, %12 : vector<16x1xf32>
    %14 = vector.broadcast %4 : vector<16x1xf32> to vector<16x32xf32>
    %15 = arith.subf %0, %14 : vector<16x32xf32>
    %cst_5 = arith.constant 9.99999974E-6 : f32
    %16 = vector.broadcast %cst_5 : f32 to vector<16x1xf32>
    %17 = arith.addf %13, %16 : vector<16x1xf32>
    %18 = math.rsqrt %17 : vector<16x1xf32>
    %19 = vector.broadcast %18 : vector<16x1xf32> to vector<16x32xf32>
    %20 = arith.mulf %15, %19 : vector<16x32xf32>
    %c0_6 = arith.constant 0 : index
    %c0_7 = arith.constant 0 : index
    %21 = vector.load %arg2[%c0_6, %c0_7] : memref<1x32xf32, #tpu.memory_space<vmem>>, vector<1x32xf32>
    %22 = vector.broadcast %21 : vector<1x32xf32> to vector<16x32xf32>
    %23 = arith.mulf %20, %22 : vector<16x32xf32>
    %c0_8 = arith.constant 0 : index
    %c0_9 = arith.constant 0 : index
    %24 = vector.load %arg3[%c0_8, %c0_9] : memref<1x32xf32, #tpu.memory_space<vmem>>, vector<1x32xf32>
    %25 = vector.broadcast %24 : vector<1x32xf32> to vector<16x32xf32>
    %26 = arith.addf %23, %25 : vector<16x32xf32>
    %c0_10 = arith.constant 0 : index
    %c0_11 = arith.constant 0 : index
    %27 = vector.load %arg4[%c0_10, %c0_11] : memref<32x128xf32, #tpu.memory_space<vmem>>, vector<32x128xf32>
    %cst_12 = arith.constant dense<0.000000e+00> : vector<16x128xf32>
    %28 = tpu.matmul %26, %27, %cst_12 {dimension_numbers = #tpu.dot_dimension_numbers<[1], [0], [0], [1], [0, 0, 1, 1], [], []>} : vector<16x32xf32>, vector<32x128xf32>, vector<16x128xf32> -> vector<16x128xf32>
    %c0_13 = arith.constant 0 : index
    %c0_14 = arith.constant 0 : index
    %29 = vector.load %arg5[%c0_13, %c0_14] : memref<1x128xf32, #tpu.memory_space<vmem>>, vector<1x128xf32>
    %30 = vector.broadcast %29 : vector<1x128xf32> to vector<16x128xf32>
    %31 = arith.addf %28, %30 : vector<16x128xf32>
    %cst_15 = arith.constant 0.000000e+00 : f32
    %32 = vector.broadcast %cst_15 : f32 to vector<16x128xf32>
    %33 = arith.maximumf %31, %32 : vector<16x128xf32>
    %c0_16 = arith.constant 0 : index
    %c0_17 = arith.constant 0 : index
    %34 = vector.load %arg6[%c0_16, %c0_17] : memref<128x32xf32, #tpu.memory_space<vmem>>, vector<128x32xf32>
    %cst_18 = arith.constant dense<0.000000e+00> : vector<16x32xf32>
    %35 = tpu.matmul %33, %34, %cst_18 {dimension_numbers = #tpu.dot_dimension_numbers<[1], [0], [0], [1], [0, 0, 1, 1], [], []>} : vector<16x128xf32>, vector<128x32xf32>, vector<16x32xf32> -> vector<16x32xf32>
    %c0_19 = arith.constant 0 : index
    %c0_20 = arith.constant 0 : index
    %36 = vector.load %arg7[%c0_19, %c0_20] : memref<1x32xf32, #tpu.memory_space<vmem>>, vector<1x32xf32>
    %37 = vector.broadcast %36 : vector<1x32xf32> to vector<16x32xf32>
    %38 = arith.addf %35, %37 : vector<16x32xf32>
    %39 = arith.addf %38, %0 : vector<16x32xf32>
    %c0_21 = arith.constant 0 : index
    %c0_22 = arith.constant 0 : index
    %40 = vector.load %arg8[%c0_21, %c0_22] : memref<16x32xf32, #tpu.memory_space<vmem>>, vector<16x32xf32>
    tpu.vector_store %arg8[%c0_21, %c0_22], %39 {strides = array<i32>} : memref<16x32xf32, #tpu.memory_space<vmem>>, vector<16x32xf32>,
    return
  }
  func.func @transform_0(%arg0: i32) -> (i32, i32) {
    %c0_i32 = arith.constant 0 : i32
    %c0_i32_0 = arith.constant 0 : i32
    return %arg0, %c0_i32 : i32, i32
  }
  func.func @transform_1(%arg0: i32) -> (i32, i32) {
    %c0_i32 = arith.constant 0 : i32
    %c0_i32_0 = arith.constant 0 : i32
    %c0_i32_1 = arith.constant 0 : i32
    return %c0_i32, %c0_i32_0 : i32, i32
  }
  func.func @transform_2(%arg0: i32) -> (i32, i32) {
    %c0_i32 = arith.constant 0 : i32
    %c0_i32_0 = arith.constant 0 : i32
    %c0_i32_1 = arith.constant 0 : i32
    return %c0_i32, %c0_i32_0 : i32, i32
  }
  func.func @transform_3(%arg0: i32) -> (i32, i32) {
    %c0_i32 = arith.constant 0 : i32
    %c0_i32_0 = arith.constant 0 : i32
    %c0_i32_1 = arith.constant 0 : i32
    return %c0_i32, %c0_i32_0 : i32, i32
  }
  func.func @transform_4(%arg0: i32) -> (i32, i32) {
    %c0_i32 = arith.constant 0 : i32
    %c0_i32_0 = arith.constant 0 : i32
    %c0_i32_1 = arith.constant 0 : i32
    return %c0_i32, %c0_i32_0 : i32, i32
  }
  func.func @transform_5(%arg0: i32) -> (i32, i32) {
    %c0_i32 = arith.constant 0 : i32
    %c0_i32_0 = arith.constant 0 : i32
    %c0_i32_1 = arith.constant 0 : i32
    return %c0_i32, %c0_i32_0 : i32, i32
  }
  func.func @transform_6(%arg0: i32) -> (i32, i32) {
    %c0_i32 = arith.constant 0 : i32
    %c0_i32_0 = arith.constant 0 : i32
    %c0_i32_1 = arith.constant 0 : i32
    return %c0_i32, %c0_i32_0 : i32, i32
  }
  func.func @transform_7(%arg0: i32) -> (i32, i32) {
    %c0_i32 = arith.constant 0 : i32
    %c0_i32_0 = arith.constant 0 : i32
    return %arg0, %c0_i32 : i32, i32
  }
}

</mosaic_0001>

<llo_original>
// kernel: tpu_custom_call.1
$region0: #{tpu_custom_call.1}
  #allocation0 [shape = 'u32[]', space=smem, size = 0x4, offset = 0x4, fixed_abs, tag = 'smem constant byte address 0x4 - core index']
  #allocation1 [shape = 'u32[144,128]{1,0:T(1,128)}', space=vmem, size = 0x12000, scoped, tag = 'internal scratch']
  %s0 = inlined_call_operand.vmem [shape: f32[16,32], index: 0, kind: input, shape index: {}]
  %s1 = inlined_call_operand.vmem [shape: f32[1,32], index: 1, kind: input, shape index: {}]
  %s2 = inlined_call_operand.vmem [shape: f32[1,32], index: 2, kind: input, shape index: {}]
  %s3 = inlined_call_operand.vmem [shape: f32[32,128], index: 3, kind: input, shape index: {}]
  %s4 = inlined_call_operand.vmem [shape: f32[1,128], index: 4, kind: input, shape index: {}]
  %s5 = inlined_call_operand.vmem [shape: f32[128,32], index: 5, kind: input, shape index: {}]
  %s6 = inlined_call_operand.vmem [shape: f32[1,32], index: 6, kind: input, shape index: {}]
  %s7 = inlined_call_operand.hbm [shape: f32[16,32], index: 7, kind: output, shape index: {}]
  %s8 = sld [smem:[#allocation0]]
  $region38: #{tpu_custom_call.1} parent=0
    _
  %s10 = ssub.s32 1, %s8
  %s11 = scalar_select 0, %s10, %s8
  $region1: #{tpu_custom_call.1} parent=0
    #allocation2 [shape = 'u8[8192]{0}', space=vmem, size = 0x2000, scoped, tag = 'output window, operand 0, single buffered']
    #allocation3 [shape = 's32[1]{0}', space=sflag, size = 0x4, scoped, tag = 'scoped memory for tpu_custom_call.1']
    %12 = vsyncpa [#allocation3], 0
    // Predicated region
    $region2: #{tpu_custom_call.1} parent=1 // pred_check
      _
    $region3: #{tpu_custom_call.1} parent=1 // pred_check_branch
      %14 = sbr.rel (0) target = $region5
    $region4: #{tpu_custom_call.1} parent=1 // pred_region
      _
    $region5: #{tpu_custom_call.1} parent=1 // pred_fallthru
      _
    // Predicated region
    $region6: #{tpu_custom_call.1} parent=1 // pred_check
      _
    $region7: #{tpu_custom_call.1} parent=1 // pred_check_branch
      %16 = sbr.rel (0) target = $region9
    $region8: #{tpu_custom_call.1} parent=1 // pred_region
      _
    $region9: #{tpu_custom_call.1} parent=1 // pred_fallthru
      _
    // Predicated region
    $region10: #{tpu_custom_call.1} parent=1 // pred_check
      _
    $region11: #{tpu_custom_call.1} parent=1 // pred_check_branch
      %18 = sbr.rel (0) target = $region13
    $region12: #{tpu_custom_call.1} parent=1 // pred_region
      _
    $region13: #{tpu_custom_call.1} parent=1 // pred_fallthru
      _
    // Predicated region
    $region14: #{tpu_custom_call.1} parent=1 // pred_check
      _
    $region15: #{tpu_custom_call.1} parent=1 // pred_check_branch
      %20 = sbr.rel (0) target = $region17
    $region16: #{tpu_custom_call.1} parent=1 // pred_region
      _
    $region17: #{tpu_custom_call.1} parent=1 // pred_fallthru
      _
    // Predicated region
    $region18: #{tpu_custom_call.1} parent=1 // pred_check
      _
    $region19: #{tpu_custom_call.1} parent=1 // pred_check_branch
      %22 = sbr.rel (0) target = $region21
    $region20: #{tpu_custom_call.1} parent=1 // pred_region
      _
    $region21: #{tpu_custom_call.1} parent=1 // pred_fallthru
      _
    // Predicated region
    $region22: #{tpu_custom_call.1} parent=1 // pred_check
      _
    $region23: #{tpu_custom_call.1} parent=1 // pred_check_branch
      %24 = sbr.rel (0) target = $region25
    $region24: #{tpu_custom_call.1} parent=1 // pred_region
      _
    $region25: #{tpu_custom_call.1} parent=1 // pred_fallthru
      _
    // Predicated region
    $region26: #{tpu_custom_call.1} parent=1 // pred_check
      _
    $region27: #{tpu_custom_call.1} parent=1 // pred_check_branch
      %26 = sbr.rel (0) target = $region29
    $region28: #{tpu_custom_call.1} parent=1 // pred_region
      _
    $region29: #{tpu_custom_call.1} parent=1 // pred_fallthru
      _
    %v27 = vld [vmem:[%s0] sm:$0xff]
    %v28 = vld [vmem:[%s0 + $0x8] sm:$0xff]
    %vm29 = vcmask 261120
    %v30 = vsel %vm29, %v27, 0.0
    %31 = vadd.xlane.f32.xlu0 %v30
    %v32 = vpop.xlane.xlu0 %31
    %v33 = vsel %vm29, %v28, 0.0
    %34 = vadd.xlane.f32.xlu0 %v33
    %v35 = vpop.xlane.xlu0 %34
    %v36 = vrcp.pop 32.0
    %v37 = vmul.f32 %v32, %v36
    %v38 = vmul.f32 %v35, %v36
    %v39 = vmul.f32 %v27, %v27
    %v40 = vmul.f32 %v28, %v28
    %v41 = vsel %vm29, %v39, 0.0
    %42 = vadd.xlane.f32.xlu0 %v41
    %v43 = vpop.xlane.xlu0 %42
    %v44 = vsel %vm29, %v40, 0.0
    %45 = vadd.xlane.f32.xlu0 %v44
    %v46 = vpop.xlane.xlu0 %45
    %v47 = vmul.f32 %v43, %v36
    %v48 = vmul.f32 %v46, %v36
    %v49 = vmul.f32 %v37, %v37
    %v50 = vmul.f32 %v38, %v38
    %v51 = vsub.f32 %v47, %v49
    %v52 = vsub.f32 %v48, %v50
    %v53 = vmax.f32 %v51, 0.0
    %v54 = vmax.f32 %v52, 0.0
    %v55 = vsub.f32 %v27, %v37
    %v56 = vsub.f32 %v28, %v38
    %v57 = vadd.f32 %v53, 1e-05
    %v58 = vadd.f32 %v54, 1e-05
    %v59 = vrsqrt.pop %v57
    %v60 = vrsqrt.pop %v58
    %v61 = vmul.f32 %v55, %v59
    %v62 = vmul.f32 %v56, %v60
    %v63 = vld [vmem:[%s1] sm:$0x1]
    %v65 = vlaneseq
    %v66 = vshrl.u32 %v65, 7
    %v67 = vsub.s32 0, %v66
    %v68 = vrot.slane %v63, %v67
    %v70 = vmul.f32 %v61, %v68
    %v71 = vmul.f32 %v62, %v68
    %v72 = vld [vmem:[%s2] sm:$0x1]
    %v74 = vlaneseq
    %v75 = vshrl.u32 %v74, 7
    %v76 = vsub.s32 0, %v75
    %v77 = vrot.slane %v72, %v76
    %v79 = vadd.f32 %v70, %v77
    %v80 = vadd.f32 %v71, %v77
    %v81 = vld [vmem:[%s3] sm:$0xff]
    %v82 = vld [vmem:[%s3 + $0x8] sm:$0xff]
    %v83 = vld [vmem:[%s3 + $0x10] sm:$0xff]
    %v84 = vld [vmem:[%s3 + $0x18] sm:$0xff]
    %v85 = vld [vmem:[%s4] sm:$0x1]
    %v87 = vlaneseq
    %v88 = vshrl.u32 %v87, 7
    %v89 = vsub.s32 0, %v88
    %v90 = vrot.slane %v85, %v89
    %v93 = vsel %vm29, %v79, 0
    %v96 = vsel %vm29, %v80, 0
    %98 = vmatprep.subr.mxu0 0.0
    %99 = vmatpush1.msra.mxu0 0.0
    %100 = vmatprep.subr.mxu0 0.0
    %101 = vmatpush1.msra.mxu0 0.0
    %102 = vmatprep.subr.mxu0 0.0
    %103 = vmatpush1.msra.mxu0 0.0
    %104 = vmatprep.subr.mxu0 0.0
    %105 = vmatpush1.msra.mxu0 0.0
    %106 = vmatprep.subr.mxu0 0.0
    %107 = vmatpush1.msra.mxu0 0.0
    %108 = vmatprep.subr.mxu0 0.0
    %109 = vmatpush1.msra.mxu0 0.0
    %110 = vmatprep.subr.mxu0 0.0
    %111 = vmatpush1.msra.mxu0 0.0
    %112 = vmatprep.subr.mxu0 0.0
    %113 = vmatpush1.msra.mxu0 0.0
    %114 = vmatprep.subr.mxu0 0.0
    %115 = vmatpush1.msra.mxu0 0.0
    %116 = vmatprep.subr.mxu0 0.0
    %117 = vmatpush1.msra.mxu0 0.0
    %118 = vmatprep.subr.mxu0 0.0
    %119 = vmatpush1.msra.mxu0 0.0
    %120 = vmatprep.subr.mxu0 0.0
    %121 = vmatpush1.msra.mxu0 0.0
    %122 = vmatprep.subr.mxu0 0.0
    %123 = vmatpush1.msra.mxu0 %v84
    %124 = vmatprep.subr.mxu0 0.0
    %125 = vmatpush1.msra.mxu0 %v83
    %126 = vmatprep.subr.mxu0 0.0
    %127 = vmatpush1.msra.mxu0 %v82
    %128 = vmatprep.subr.mxu0 0.0
    %129 = vmatpush1.msra.mxu0 %v81
    %130 = vmatprep.subr.mxu0 0.0
    %131 = vmatpush2.msra.mxu0 0.0
    %132 = vmatprep.subr.mxu0 0.0
    %133 = vmatpush2.msra.mxu0 0.0
    %134 = vmatprep.subr.mxu0 0.0
    %135 = vmatpush2.msra.mxu0 0.0
    %136 = vmatprep.subr.mxu0 0.0
    %137 = vmatpush2.msra.mxu0 0.0
    %138 = vmatprep.subr.mxu0 0.0
    %139 = vmatpush2.msra.mxu0 0.0
    %140 = vmatprep.subr.mxu0 0.0
    %141 = vmatpush2.msra.mxu0 0.0
    %142 = vmatprep.subr.mxu0 0.0
    %143 = vmatpush2.msra.mxu0 0.0
    %144 = vmatprep.subr.mxu0 0.0
    %145 = vmatpush2.msra.mxu0 0.0
    %146 = vmatprep.subr.mxu0 0.0
    %147 = vmatpush2.msra.mxu0 0.0
    %148 = vmatprep.subr.mxu0 0.0
    %149 = vmatpush2.msra.mxu0 0.0
    %150 = vmatprep.subr.mxu0 0.0
    %151 = vmatpush2.msra.mxu0 0.0
    %152 = vmatprep.subr.mxu0 0.0
    %153 = vmatpush2.msra.mxu0 0.0
    %154 = vmatprep.subr.mxu0 0.0
    %155 = vmatpush2.msra.mxu0 0.0
    %156 = vmatprep.subr.mxu0 0.0
    %157 = vmatpush2.msra.mxu0 0.0
    %158 = vmatprep.subr.mxu0 0.0
    %159 = vmatpush2.msra.mxu0 0.0
    %160 = vmatprep.subr.mxu0 0.0
    %161 = vmatpush2.msra.mxu0 0.0
    %162 = vmatprep.mubr.f32.mxu0 0.0
    %163 = vmatmul.mubr.f32.gmra.mxu0 %v93
    %v164 = vpop.f32.mrf.mxu0
    %v165 = vadd.f32 %v90, %v164
    %v166 = vpop.f32.mrf.mxu0
    %167 = vmatprep.mubr.f32.mxu0 0.0
    %168 = vmatmul.mubr.f32.gmra.mxu0 %v96
    %v169 = vpop.f32.mrf.mxu0
    %v170 = vadd.f32 %v90, %v169
    %v171 = vpop.f32.mrf.mxu0
    %172 = vdwg.mxu0
    %v173 = vmax.f32 %v165, 0.0
    %v174 = vmax.f32 %v170, 0.0
    %v175 = vld [vmem:[%s5] sm:$0xff]
    %v176 = vld [vmem:[%s5 + $0x8] sm:$0xff]
    %v177 = vld [vmem:[%s5 + $0x10] sm:$0xff]
    %v178 = vld [vmem:[%s5 + $0x18] sm:$0xff]
    %v179 = vld [vmem:[%s5 + $0x20] sm:$0xff]
    %v180 = vld [vmem:[%s5 + $0x28] sm:$0xff]
    %v181 = vld [vmem:[%s5 + $0x30] sm:$0xff]
    %v182 = vld [vmem:[%s5 + $0x38] sm:$0xff]
    %v183 = vld [vmem:[%s5 + $0x40] sm:$0xff]
    %v184 = vld [vmem:[%s5 + $0x48] sm:$0xff]
    %v185 = vld [vmem:[%s5 + $0x50] sm:$0xff]
    %v186 = vld [vmem:[%s5 + $0x58] sm:$0xff]
    %v187 = vld [vmem:[%s5 + $0x60] sm:$0xff]
    %v188 = vld [vmem:[%s5 + $0x68] sm:$0xff]
    %v189 = vld [vmem:[%s5 + $0x70] sm:$0xff]
    %v190 = vld [vmem:[%s5 + $0x78] sm:$0xff]
    %v191 = vld [vmem:[%s6] sm:$0x1]
    %v193 = vlaneseq
    %v194 = vshrl.u32 %v193, 7
    %v195 = vsub.s32 0, %v194
    %v196 = vrot.slane %v191, %v195
    %198 = vmatprep.subr.mxu0 0.0
    %199 = vmatpush1.msra.mxu0 %v190
    %200 = vmatprep.subr.mxu0 0.0
    %201 = vmatpush1.msra.mxu0 %v189
    %202 = vmatprep.subr.mxu0 0.0
    %203 = vmatpush1.msra.mxu0 %v188
    %204 = vmatprep.subr.mxu0 0.0
    %205 = vmatpush1.msra.mxu0 %v187
    %206 = vmatprep.subr.mxu0 0.0
    %207 = vmatpush1.msra.mxu0 %v186
    %208 = vmatprep.subr.mxu0 0.0
    %209 = vmatpush1.msra.mxu0 %v185
    %210 = vmatprep.subr.mxu0 0.0
    %211 = vmatpush1.msra.mxu0 %v184
    %212 = vmatprep.subr.mxu0 0.0
    %213 = vmatpush1.msra.mxu0 %v183
    %214 = vmatprep.subr.mxu0 0.0
    %215 = vmatpush1.msra.mxu0 %v182
    %216 = vmatprep.subr.mxu0 0.0
    %217 = vmatpush1.msra.mxu0 %v181
    %218 = vmatprep.subr.mxu0 0.0
    %219 = vmatpush1.msra.mxu0 %v180
    %220 = vmatprep.subr.mxu0 0.0
    %221 = vmatpush1.msra.mxu0 %v179
    %222 = vmatprep.subr.mxu0 0.0
    %223 = vmatpush1.msra.mxu0 %v178
    %224 = vmatprep.subr.mxu0 0.0
    %225 = vmatpush1.msra.mxu0 %v177
    %226 = vmatprep.subr.mxu0 0.0
    %227 = vmatpush1.msra.mxu0 %v176
    %228 = vmatprep.subr.mxu0 0.0
    %229 = vmatpush1.msra.mxu0 %v175
    %230 = vmatprep.subr.mxu0 0.0
    %231 = vmatpush2.msra.mxu0 0.0
    %232 = vmatprep.subr.mxu0 0.0
    %233 = vmatpush2.msra.mxu0 0.0
    %234 = vmatprep.subr.mxu0 0.0
    %235 = vmatpush2.msra.mxu0 0.0
    %236 = vmatprep.subr.mxu0 0.0
    %237 = vmatpush2.msra.mxu0 0.0
    %238 = vmatprep.subr.mxu0 0.0
    %239 = vmatpush2.msra.mxu0 0.0
    %240 = vmatprep.subr.mxu0 0.0
    %241 = vmatpush2.msra.mxu0 0.0
    %242 = vmatprep.subr.mxu0 0.0
    %243 = vmatpush2.msra.mxu0 0.0
    %244 = vmatprep.subr.mxu0 0.0
    %245 = vmatpush2.msra.mxu0 0.0
    %246 = vmatprep.subr.mxu0 0.0
    %247 = vmatpush2.msra.mxu0 0.0
    %248 = vmatprep.subr.mxu0 0.0
    %249 = vmatpush2.msra.mxu0 0.0
    %250 = vmatprep.subr.mxu0 0.0
    %251 = vmatpush2.msra.mxu0 0.0
    %252 = vmatprep.subr.mxu0 0.0
    %253 = vmatpush2.msra.mxu0 0.0
    %254 = vmatprep.subr.mxu0 0.0
    %255 = vmatpush2.msra.mxu0 0.0
    %256 = vmatprep.subr.mxu0 0.0
    %257 = vmatpush2.msra.mxu0 0.0
    %258 = vmatprep.subr.mxu0 0.0
    %259 = vmatpush2.msra.mxu0 0.0
    %260 = vmatprep.subr.mxu0 0.0
    %261 = vmatpush2.msra.mxu0 0.0
    %262 = vmatprep.mubr.f32.mxu0 0.0
    %263 = vmatmul.mubr.f32.gmra.mxu0 %v173
    %v264 = vpop.f32.mrf.mxu0
    %v265 = vadd.f32 %v196, %v264
    %v266 = vpop.f32.mrf.mxu0
    %267 = vmatprep.mubr.f32.mxu0 0.0
    %268 = vmatmul.mubr.f32.gmra.mxu0 %v174
    %v269 = vpop.f32.mrf.mxu0
    %v270 = vadd.f32 %v196, %v269
    %v271 = vpop.f32.mrf.mxu0
    %272 = vdwg.mxu0
    %v273 = vadd.f32 %v265, %v27
    %v274 = vadd.f32 %v270, %v28
    %275 = vst.msk [vmem:[#allocation2] sm:$0xff] %vm29, %v273
    %276 = vst.msk [vmem:[#allocation2 + $0x8] sm:$0xff] %vm29, %v274
    // Predicated region
    $region30: #{tpu_custom_call.1} parent=1 // pred_check
      _
    $region31: #{tpu_custom_call.1} parent=1 // pred_check_branch
      %278 = sbr.rel (0) target = $region33
    $region32: #{tpu_custom_call.1} parent=1 // pred_region
      %s280 = ssub.s32 256, 256
      %281 = vsyncadd [#allocation3], %s280
      %s282 = sshll.u32 [#allocation2], 4
      %s283 = int_to_ptr.vmem [resolvable:$true] %s282
      %288 = dma.vmem_to_hbm [thread:$0]  %s283, 256, %s7, [#allocation3], 128, 128, 8
    $region33: #{tpu_custom_call.1} parent=1 // pred_fallthru
      _
    // Predicated region
    $region34: #{tpu_custom_call.1} parent=1 // pred_check
      _
    $region35: #{tpu_custom_call.1} parent=1 // pred_check_branch
      %290 = sbr.rel (0) target = $region37
    $region36: #{tpu_custom_call.1} parent=1 // pred_region
      %291 = dma.done [#allocation3], 256
    $region37: #{tpu_custom_call.1} parent=1 // pred_fallthru
      _
    %292 = vsyncpa [#allocation3], 1

</llo_original>
